<compile_context>
chip_gen: v5e
topology: v5e:2x2
jax: 0.10.0
libtpu: 0.0.40
codegen_flags: <defaults>
</compile_context>

<pallas_src>
import jax
import jax.numpy as jnp
import numpy as np
from jax import lax
from jax.experimental import pallas as pl
from jax.experimental.pallas import tpu as pltpu


# ----------------------------- Pallas kernel -------------------------------

def _f_sample_kernel(x_ref, rt_ref, w_ref, b_ref, o_ref):
    # x_ref : (BN*Cin,  Hin*Win )   VMEM  lane-dense block of BN input images
    # rt_ref: (Hin*Win, Hout*Wout)  VMEM  kron(Ah, Aw)^T, resident across steps
    # w_ref : (BN*Cout, BN*Cin  )   VMEM  kron(I_BN, w_fused)  (BN folded in)
    # b_ref : (BN*Cout, 1       )   VMEM  folded BN bias, tiled per image
    # o_ref : (BN*Cout, Hout*Wout)  VMEM  lane-dense output slab

    # Matmul 1: fused bilinear H+W resize (deep K = Hin*Win, lane-dense N).
    z = jnp.dot(x_ref[...], rt_ref[...], preferred_element_type=jnp.float32)

    # Matmul 2: 1x1 conv with BN scale folded in, block-diagonal over the BN
    # images of this grid step (lane-dense N = Hout*Wout).
    y = jnp.dot(w_ref[...], z, preferred_element_type=jnp.float32)

    # Bias + ReLU + single lane-dense slab store.
    o_ref[...] = jnp.maximum(y + b_ref[...], 0.0).astype(o_ref.dtype)


# --------------------------- host-side helpers -----------------------------

def _bilinear_matrix(d_in, d_out):
    """(d_out, d_in) matrix implementing 1-D bilinear resize with PyTorch's
    align_corners=False (half-pixel) convention, with edge clamping."""
    i = np.arange(d_out, dtype=np.float64)
    src = np.maximum((i + 0.5) * (d_in / d_out) - 0.5, 0.0)
    i0 = np.minimum(np.floor(src), d_in - 1).astype(np.int64)
    frac = src - i0
    i1 = np.minimum(i0 + 1, d_in - 1)
    a = np.zeros((d_out, d_in), np.float64)
    rows = np.arange(d_out)
    np.add.at(a, (rows, i0), 1.0 - frac)
    np.add.at(a, (rows, i1), frac)
    return a


def _pick_images_per_step(n, cin, max_images=8):
    """Largest divisor of n (<= max_images); prefer blocks whose row count
    (bn*cin) is sublane-aligned so the x block tiles without padding."""
    divisors = [d for d in range(1, min(n, max_images) + 1) if n % d == 0]
    aligned = [d for d in divisors if d == n or (d * cin) % 8 == 0]
    return max(aligned) if aligned else max(divisors)


def f_sample_forward(x, x_out_shape, params, *, max_images_per_step=8):
    """F_Sample forward.  x: (N, Cin, Hin, Win) NCHW; x_out_shape[2:4] gives the
    target spatial size.  Returns (N, 2*Cin, Hout, Wout) NCHW, float32."""
    w_fused, b_fused = params
    n, cin, hin, win = x.shape
    hout, wout = int(x_out_shape[2]), int(x_out_shape[3])
    cout = w_fused.shape[0]
    hwin, hwout = hin * win, hout * wout

    bn = _pick_images_per_step(n, cin, max_images_per_step)

    # Fused H+W bilinear resize operator (exact in f32; rows are 2x2-sparse).
    ah = _bilinear_matrix(hin, hout)                         # (Hout, Hin)
    aw = _bilinear_matrix(win, wout)                         # (Wout, Win)
    rt = jnp.asarray(np.kron(ah, aw).T, jnp.float32)         # (Hin*Win, Hout*Wout)

    # Block-diagonal 1x1-conv weights / per-image-tiled bias for one grid step.
    w_blk = jnp.kron(jnp.eye(bn, dtype=jnp.float32),
                     w_fused.astype(jnp.float32))            # (BN*Cout, BN*Cin)
    b_blk = jnp.tile(b_fused.astype(jnp.float32), bn).reshape(bn * cout, 1)

    # Free, contiguous re-view at the wrapper boundary (no transposes).
    x2d = x.astype(jnp.float32).reshape(n * cin, hwin)       # lane-dense DMA view

    out2d = pl.pallas_call(
        _f_sample_kernel,
        out_shape=jax.ShapeDtypeStruct((n * cout, hwout), jnp.float32),
        grid=(n // bn,),
        in_specs=[
            pl.BlockSpec((bn * cin, hwin), lambda b: (b, 0)),       # x block
            pl.BlockSpec((hwin, hwout), lambda b: (0, 0)),          # Rt (resident)
            pl.BlockSpec((bn * cout, bn * cin), lambda b: (0, 0)),  # conv weights
            pl.BlockSpec((bn * cout, 1), lambda b: (0, 0)),         # folded bias
        ],
        out_specs=pl.BlockSpec((bn * cout, hwout), lambda b: (b, 0)),
        compiler_params=pltpu.CompilerParams(
            # v7x: use pltpu.CORE_PARALLEL here to shard batch blocks over 2 TCs.
            dimension_semantics=("parallel",),
            vmem_limit_bytes=32 * 1024 * 1024,
        ),
    )(x2d, rt, w_blk, b_blk)

    # Free reshape of the contiguous (N*Cout, Hout*Wout) result back to NCHW.
    return out2d.reshape(n, cout, hout, wout)


# --------------------------- parameter creation -----------------------------

def init_params(key, inchannels, eps=1e-5):
    """Raw PyTorch-style parameters for Conv2d(1x1, bias=False) + BatchNorm2d."""
    outchannels = 2 * inchannels
    kw, kg, kb, km, kv = jax.random.split(key, 5)
    w = 0.1 * jax.random.normal(kw, (outchannels, inchannels), jnp.float32)
    gamma = 1.0 + 0.1 * jax.random.normal(kg, (outchannels,), jnp.float32)
    beta = 0.1 * jax.random.normal(kb, (outchannels,), jnp.float32)
    mean = 0.1 * jax.random.normal(km, (outchannels,), jnp.float32)
    var = jnp.abs(jax.random.normal(kv, (outchannels,), jnp.float32)) + 0.5
    return (w, gamma, beta, mean, var, eps)


def fold_bn(raw):
    """Fold inference-mode BatchNorm into the 1x1 conv: w' = s*w, b' = beta - mean*s."""
    w, gamma, beta, mean, var, eps = raw
    scale = gamma / jnp.sqrt(var + eps)
    return w * scale[:, None], beta - mean * scale


# ------------------------------ pure-JAX ref --------------------------------

def _src_index(d_in, d_out):
    i = jnp.arange(d_out, dtype=jnp.float32)
    src = jnp.maximum((i + 0.5) * (d_in / d_out) - 0.5, 0.0)
    i0 = jnp.minimum(jnp.floor(src), d_in - 1).astype(jnp.int32)
    frac = src - i0.astype(jnp.float32)
    i1 = jnp.minimum(i0 + 1, d_in - 1)
    return i0, i1, frac


def reference_forward(x, x_out_shape, raw):
    """Independent reference: bilinear (align_corners=False) resize via gathers,
    then 1x1 conv, BatchNorm (running stats), ReLU."""
    w, gamma, beta, mean, var, eps = raw
    hout, wout = int(x_out_shape[2]), int(x_out_shape[3])
    hin, win = x.shape[2], x.shape[3]
    h0, h1, fh = _src_index(hin, hout)
    w0, w1, fw = _src_index(win, wout)
    xh = (x[:, :, h0, :] * (1.0 - fh)[None, None, :, None]
          + x[:, :, h1, :] * fh[None, None, :, None])
    xd = xh[:, :, :, w0] * (1.0 - fw) + xh[:, :, :, w1] * fw
    y = jnp.einsum('oc,nchw->nohw', w, xd, precision=lax.Precision.HIGHEST)
    inv = gamma / jnp.sqrt(var + eps)
    y = (y - mean[None, :, None, None]) * inv[None, :, None, None] \
        + beta[None, :, None, None]
    return jnp.maximum(y, 0.0)


# ---------------------------------- main ------------------------------------

if __name__ == "__main__":
    key = jax.random.PRNGKey(0)
    kx, kp = jax.random.split(key)

    # F_Sample(inchannels=4): outchannels = 8.  x is resized to x_out's spatial size.
    n, inchannels = 2, 4
    hin, win = 32, 32
    hout, wout = 16, 16

    x = jax.random.normal(kx, (n, inchannels, hin, win), jnp.float32)          # NCHW
    x_out = jnp.zeros((n, 2 * inchannels, hout, wout), jnp.float32)            # only H,W used

    raw = init_params(kp, inchannels)
    params = fold_bn(raw)

    out = jax.block_until_ready(f_sample_forward(x, x_out.shape, params))
    assert out.shape == (n, 2 * inchannels, hout, wout)

    ref = jax.block_until_ready(reference_forward(x, x_out.shape, raw))
    max_err = float(jnp.max(jnp.abs(out - ref)))
    # f32 multi-pass MXU contraction matches the gather-based f32 reference to
    # ~1e-6; the tolerance also covers backends that contract f32 matmul operands
    # in bf16 passes (worst case ~1e-2 at these O(1) magnitudes).
    assert max_err < 2e-2, f"mismatch vs reference: {max_err}"

    print("KERNEL_OK")
</pallas_src>

<mosaic_0001>
module attributes {stable_mosaic.version = 11 : i64} {
  func.func @_f_sample_kernel(%arg0: i32, %arg1: memref<8x1024xf32, #tpu.memory_space<vmem>>, %arg2: memref<1024x256xf32, #tpu.memory_space<vmem>>, %arg3: memref<16x8xf32, #tpu.memory_space<vmem>>, %arg4: memref<16x1xf32, #tpu.memory_space<vmem>>, %arg5: memref<16x256xf32, #tpu.memory_space<vmem>>) attributes {dimension_semantics = [#tpu.dimension_semantics<parallel>], iteration_bounds = array<i64: 1>, scalar_prefetch = 0 : i64, scratch_operands = 0 : i64, tpu.core_type = #tpu.core_type<tc>, window_params = [{transform_indices = @transform_0, window_bounds = array<i64: 8, 1024>}, {pipeline_mode = #tpu.pipeline_mode<synchronous>, transform_indices = @transform_1, window_bounds = array<i64: 1024, 256>}, {pipeline_mode = #tpu.pipeline_mode<synchronous>, transform_indices = @transform_2, window_bounds = array<i64: 16, 8>}, {pipeline_mode = #tpu.pipeline_mode<synchronous>, transform_indices = @transform_3, window_bounds = array<i64: 16, 1>}, {transform_indices = @transform_4, window_bounds = array<i64: 16, 256>}]} {
    %c0 = arith.constant 0 : index
    %c0_0 = arith.constant 0 : index
    %0 = vector.load %arg1[%c0, %c0_0] : memref<8x1024xf32, #tpu.memory_space<vmem>>, vector<8x1024xf32>
    %c0_1 = arith.constant 0 : index
    %c0_2 = arith.constant 0 : index
    %1 = vector.load %arg2[%c0_1, %c0_2] : memref<1024x256xf32, #tpu.memory_space<vmem>>, vector<1024x256xf32>
    %cst = arith.constant dense<0.000000e+00> : vector<8x256xf32>
    %2 = tpu.matmul %0, %1, %cst {dimension_numbers = #tpu.dot_dimension_numbers<[1], [0], [0], [1], [0, 0, 1, 1], [], []>} : vector<8x1024xf32>, vector<1024x256xf32>, vector<8x256xf32> -> vector<8x256xf32>
    %c0_3 = arith.constant 0 : index
    %c0_4 = arith.constant 0 : index
    %3 = vector.load %arg3[%c0_3, %c0_4] : memref<16x8xf32, #tpu.memory_space<vmem>>, vector<16x8xf32>
    %cst_5 = arith.constant dense<0.000000e+00> : vector<16x256xf32>
    %4 = tpu.matmul %3, %2, %cst_5 {dimension_numbers = #tpu.dot_dimension_numbers<[1], [0], [0], [1], [0, 0, 1, 1], [], []>} : vector<16x8xf32>, vector<8x256xf32>, vector<16x256xf32> -> vector<16x256xf32>
    %c0_6 = arith.constant 0 : index
    %c0_7 = arith.constant 0 : index
    %5 = vector.load %arg4[%c0_6, %c0_7] : memref<16x1xf32, #tpu.memory_space<vmem>>, vector<16x1xf32>
    %6 = vector.broadcast %5 : vector<16x1xf32> to vector<16x256xf32>
    %7 = arith.addf %4, %6 : vector<16x256xf32>
    %cst_8 = arith.constant 0.000000e+00 : f32
    %8 = vector.broadcast %cst_8 : f32 to vector<16x256xf32>
    %9 = arith.maximumf %7, %8 : vector<16x256xf32>
    %c0_9 = arith.constant 0 : index
    %c0_10 = arith.constant 0 : index
    %10 = vector.load %arg5[%c0_9, %c0_10] : memref<16x256xf32, #tpu.memory_space<vmem>>, vector<16x256xf32>
    tpu.vector_store %arg5[%c0_9, %c0_10], %9 {strides = array<i32>} : memref<16x256xf32, #tpu.memory_space<vmem>>, vector<16x256xf32>,
    return
  }
  func.func @transform_0(%arg0: i32) -> (i32, i32) {
    %c0_i32 = arith.constant 0 : i32
    %c0_i32_0 = arith.constant 0 : i32
    return %arg0, %c0_i32 : i32, i32
  }
  func.func @transform_1(%arg0: i32) -> (i32, i32) {
    %c0_i32 = arith.constant 0 : i32
    %c0_i32_0 = arith.constant 0 : i32
    %c0_i32_1 = arith.constant 0 : i32
    return %c0_i32, %c0_i32_0 : i32, i32
  }
  func.func @transform_2(%arg0: i32) -> (i32, i32) {
    %c0_i32 = arith.constant 0 : i32
    %c0_i32_0 = arith.constant 0 : i32
    %c0_i32_1 = arith.constant 0 : i32
    return %c0_i32, %c0_i32_0 : i32, i32
  }
  func.func @transform_3(%arg0: i32) -> (i32, i32) {
    %c0_i32 = arith.constant 0 : i32
    %c0_i32_0 = arith.constant 0 : i32
    %c0_i32_1 = arith.constant 0 : i32
    return %c0_i32, %c0_i32_0 : i32, i32
  }
  func.func @transform_4(%arg0: i32) -> (i32, i32) {
    %c0_i32 = arith.constant 0 : i32
    %c0_i32_0 = arith.constant 0 : i32
    return %arg0, %c0_i32 : i32, i32
  }
}

</mosaic_0001>

<llo_original>
// kernel: tpu_custom_call.1
$region0: #{tpu_custom_call.1}
  #allocation0 [shape = 'u32[]', space=smem, size = 0x4, offset = 0x4, fixed_abs, tag = 'smem constant byte address 0x4 - core index']
  #allocation1 [shape = 'u32[72,128]{1,0:T(1,128)}', space=vmem, size = 0x9000, scoped, tag = 'internal scratch']
  %s0 = inlined_call_operand.hbm [shape: f32[8,1024], index: 0, kind: input, shape index: {}]
  %s1 = inlined_call_operand.hbm [shape: f32[1024,256], index: 1, kind: input, shape index: {}]
  %s2 = inlined_call_operand.vmem [shape: f32[16,8], index: 2, kind: input, shape index: {}]
  %s3 = inlined_call_operand.vmem [shape: f32[16,1], index: 3, kind: input, shape index: {}]
  %s4 = inlined_call_operand.hbm [shape: f32[16,256], index: 4, kind: output, shape index: {}]
  %s5 = sld [smem:[#allocation0]]
  $region34: #{tpu_custom_call.1} parent=0
    _
  %s7 = ssub.s32 1, %s5
  %s8 = scalar_select 0, %s7, %s5
  $region1: #{tpu_custom_call.1} parent=0
    #allocation2 [shape = 'u8[32768]{0}', space=vmem, size = 0x8000, scoped, tag = 'input window, operand 0, single buffered']
    #allocation3 [shape = 's32[1]{0}', space=sflag, size = 0x4, scoped, tag = 'scoped memory for tpu_custom_call.1']
    #allocation4 [shape = 's32[1]{0}', space=sflag, size = 0x4, scoped, tag = 'scoped memory for tpu_custom_call.1']
    #allocation5 [shape = 'u8[1048576]{0}', space=vmem, size = 0x100000, scoped, tag = 'input window, operand 1, single buffered']
    #allocation6 [shape = 's32[1]{0}', space=sflag, size = 0x4, scoped, tag = 'scoped memory for tpu_custom_call.1']
    #allocation7 [shape = 'u8[16384]{0}', space=vmem, size = 0x4000, scoped, tag = 'output window, operand 0, single buffered']
    %9 = vsyncpa [#allocation3], 0
    %10 = vsyncpa [#allocation6], 0
    %11 = vsyncpa [#allocation4], 0
    // Predicated region
    $region2: #{tpu_custom_call.1} parent=1 // pred_check
      _
    $region3: #{tpu_custom_call.1} parent=1 // pred_check_branch
      %13 = sbr.rel (0) target = $region5
    $region4: #{tpu_custom_call.1} parent=1 // pred_region
      %15 = vsyncadd [#allocation3], 0
      %s17 = sshll.u32 %s0, 4
      %s18 = int_to_ptr.hbm [resolvable:$true] %s17
      %s19 = sshll.u32 [#allocation2], 4
      %s20 = int_to_ptr.vmem [resolvable:$true] %s19
      %22 = dma.hbm_to_vmem [thread:$0]  %s18, 1024, %s20, [#allocation3]
    $region5: #{tpu_custom_call.1} parent=1 // pred_fallthru
      _
    // Predicated region
    $region6: #{tpu_custom_call.1} parent=1 // pred_check
      _
    $region7: #{tpu_custom_call.1} parent=1 // pred_check_branch
      %24 = sbr.rel (0) target = $region9
    $region8: #{tpu_custom_call.1} parent=1 // pred_region
      %26 = vsyncadd [#allocation6], 0
      %s27 = sshll.u32 %s1, 4
      %s28 = int_to_ptr.hbm [resolvable:$true] %s27
      %s29 = sshll.u32 [#allocation5], 4
      %s30 = int_to_ptr.vmem [resolvable:$true] %s29
      %35 = dma.hbm_to_vmem [thread:$0]  %s28, 32768, %s30, [#allocation6], 256, 256, 16
    $region9: #{tpu_custom_call.1} parent=1 // pred_fallthru
      _
    // Predicated region
    $region10: #{tpu_custom_call.1} parent=1 // pred_check
      _
    $region11: #{tpu_custom_call.1} parent=1 // pred_check_branch
      %37 = sbr.rel (0) target = $region13
    $region12: #{tpu_custom_call.1} parent=1 // pred_region
      _
    $region13: #{tpu_custom_call.1} parent=1 // pred_fallthru
      _
    // Predicated region
    $region14: #{tpu_custom_call.1} parent=1 // pred_check
      _
    $region15: #{tpu_custom_call.1} parent=1 // pred_check_branch
      %39 = sbr.rel (0) target = $region17
    $region16: #{tpu_custom_call.1} parent=1 // pred_region
      _
    $region17: #{tpu_custom_call.1} parent=1 // pred_fallthru
      _
    // Predicated region
    $region18: #{tpu_custom_call.1} parent=1 // pred_check
      _
    $region19: #{tpu_custom_call.1} parent=1 // pred_check_branch
      %41 = sbr.rel (0) target = $region21
    $region20: #{tpu_custom_call.1} parent=1 // pred_region
      %43 = dma.done [#allocation3], 1024
    $region21: #{tpu_custom_call.1} parent=1 // pred_fallthru
      _
    // Predicated region
    $region22: #{tpu_custom_call.1} parent=1 // pred_check
      _
    $region23: #{tpu_custom_call.1} parent=1 // pred_check_branch
      %45 = sbr.rel (0) target = $region25
    $region24: #{tpu_custom_call.1} parent=1 // pred_region
      %47 = dma.done [#allocation6], 32768
    $region25: #{tpu_custom_call.1} parent=1 // pred_fallthru
      _
    %v48 = vld [vmem:[#allocation2] sm:$0xff]
    %v49 = vld [vmem:[#allocation2 + $0x8] sm:$0xff]
    %v50 = vld [vmem:[#allocation2 + $0x10] sm:$0xff]
    %v51 = vld [vmem:[#allocation2 + $0x18] sm:$0xff]
    %v52 = vld [vmem:[#allocation2 + $0x20] sm:$0xff]
    %v53 = vld [vmem:[#allocation2 + $0x28] sm:$0xff]
    %v54 = vld [vmem:[#allocation2 + $0x30] sm:$0xff]
    %v55 = vld [vmem:[#allocation2 + $0x38] sm:$0xff]
    %v56 = vld [vmem:[#allocation5] sm:$0xff]
    %v57 = vld [vmem:[#allocation5 + $0x8] sm:$0xff]
    %v58 = vld [vmem:[#allocation5 + $0x10] sm:$0xff]
    %v59 = vld [vmem:[#allocation5 + $0x18] sm:$0xff]
    %v60 = vld [vmem:[#allocation5 + $0x20] sm:$0xff]
    %v61 = vld [vmem:[#allocation5 + $0x28] sm:$0xff]
    %v62 = vld [vmem:[#allocation5 + $0x30] sm:$0xff]
    %v63 = vld [vmem:[#allocation5 + $0x38] sm:$0xff]
    %v64 = vld [vmem:[#allocation5 + $0x40] sm:$0xff]
    %v65 = vld [vmem:[#allocation5 + $0x48] sm:$0xff]
    %v66 = vld [vmem:[#allocation5 + $0x50] sm:$0xff]
    %v67 = vld [vmem:[#allocation5 + $0x58] sm:$0xff]
    %v68 = vld [vmem:[#allocation5 + $0x60] sm:$0xff]
    %v69 = vld [vmem:[#allocation5 + $0x68] sm:$0xff]
    %v70 = vld [vmem:[#allocation5 + $0x70] sm:$0xff]
    %v71 = vld [vmem:[#allocation5 + $0x78] sm:$0xff]
    %v72 = vld [vmem:[#allocation5 + $0x80] sm:$0xff]
    %v73 = vld [vmem:[#allocation5 + $0x88] sm:$0xff]
    %v74 = vld [vmem:[#allocation5 + $0x90] sm:$0xff]
    %v75 = vld [vmem:[#allocation5 + $0x98] sm:$0xff]
    %v76 = vld [vmem:[#allocation5 + $0xa0] sm:$0xff]
    %v77 = vld [vmem:[#allocation5 + $0xa8] sm:$0xff]
    %v78 = vld [vmem:[#allocation5 + $0xb0] sm:$0xff]
    %v79 = vld [vmem:[#allocation5 + $0xb8] sm:$0xff]
    %v80 = vld [vmem:[#allocation5 + $0xc0] sm:$0xff]
    %v81 = vld [vmem:[#allocation5 + $0xc8] sm:$0xff]
    %v82 = vld [vmem:[#allocation5 + $0xd0] sm:$0xff]
    %v83 = vld [vmem:[#allocation5 + $0xd8] sm:$0xff]
    %v84 = vld [vmem:[#allocation5 + $0xe0] sm:$0xff]
    %v85 = vld [vmem:[#allocation5 + $0xe8] sm:$0xff]
    %v86 = vld [vmem:[#allocation5 + $0xf0] sm:$0xff]
    %v87 = vld [vmem:[#allocation5 + $0xf8] sm:$0xff]
    %v88 = vld [vmem:[#allocation5 + $0x100] sm:$0xff]
    %v89 = vld [vmem:[#allocation5 + $0x108] sm:$0xff]
    %v90 = vld [vmem:[#allocation5 + $0x110] sm:$0xff]
    %v91 = vld [vmem:[#allocation5 + $0x118] sm:$0xff]
    %v92 = vld [vmem:[#allocation5 + $0x120] sm:$0xff]
    %v93 = vld [vmem:[#allocation5 + $0x128] sm:$0xff]
    %v94 = vld [vmem:[#allocation5 + $0x130] sm:$0xff]
    %v95 = vld [vmem:[#allocation5 + $0x138] sm:$0xff]
    %v96 = vld [vmem:[#allocation5 + $0x140] sm:$0xff]
    %v97 = vld [vmem:[#allocation5 + $0x148] sm:$0xff]
    %v98 = vld [vmem:[#allocation5 + $0x150] sm:$0xff]
    %v99 = vld [vmem:[#allocation5 + $0x158] sm:$0xff]
    %v100 = vld [vmem:[#allocation5 + $0x160] sm:$0xff]
    %v101 = vld [vmem:[#allocation5 + $0x168] sm:$0xff]
    %v102 = vld [vmem:[#allocation5 + $0x170] sm:$0xff]
    %v103 = vld [vmem:[#allocation5 + $0x178] sm:$0xff]
    %v104 = vld [vmem:[#allocation5 + $0x180] sm:$0xff]
    %v105 = vld [vmem:[#allocation5 + $0x188] sm:$0xff]
    %v106 = vld [vmem:[#allocation5 + $0x190] sm:$0xff]
    %v107 = vld [vmem:[#allocation5 + $0x198] sm:$0xff]
    %v108 = vld [vmem:[#allocation5 + $0x1a0] sm:$0xff]
    %v109 = vld [vmem:[#allocation5 + $0x1a8] sm:$0xff]
    %v110 = vld [vmem:[#allocation5 + $0x1b0] sm:$0xff]
    %v111 = vld [vmem:[#allocation5 + $0x1b8] sm:$0xff]
    %v112 = vld [vmem:[#allocation5 + $0x1c0] sm:$0xff]
    %v113 = vld [vmem:[#allocation5 + $0x1c8] sm:$0xff]
    %v114 = vld [vmem:[#allocation5 + $0x1d0] sm:$0xff]
    %v115 = vld [vmem:[#allocation5 + $0x1d8] sm:$0xff]
    %v116 = vld [vmem:[#allocation5 + $0x1e0] sm:$0xff]
    %v117 = vld [vmem:[#allocation5 + $0x1e8] sm:$0xff]
    %v118 = vld [vmem:[#allocation5 + $0x1f0] sm:$0xff]
    %v119 = vld [vmem:[#allocation5 + $0x1f8] sm:$0xff]
    %v120 = vld [vmem:[#allocation5 + $0x200] sm:$0xff]
    %v121 = vld [vmem:[#allocation5 + $0x208] sm:$0xff]
    %v122 = vld [vmem:[#allocation5 + $0x210] sm:$0xff]
    %v123 = vld [vmem:[#allocation5 + $0x218] sm:$0xff]
    %v124 = vld [vmem:[#allocation5 + $0x220] sm:$0xff]
    %v125 = vld [vmem:[#allocation5 + $0x228] sm:$0xff]
    %v126 = vld [vmem:[#allocation5 + $0x230] sm:$0xff]
    %v127 = vld [vmem:[#allocation5 + $0x238] sm:$0xff]
    %v128 = vld [vmem:[#allocation5 + $0x240] sm:$0xff]
    %v129 = vld [vmem:[#allocation5 + $0x248] sm:$0xff]
    %v130 = vld [vmem:[#allocation5 + $0x250] sm:$0xff]
    %v131 = vld [vmem:[#allocation5 + $0x258] sm:$0xff]
    %v132 = vld [vmem:[#allocation5 + $0x260] sm:$0xff]
    %v133 = vld [vmem:[#allocation5 + $0x268] sm:$0xff]
    %v134 = vld [vmem:[#allocation5 + $0x270] sm:$0xff]
    %v135 = vld [vmem:[#allocation5 + $0x278] sm:$0xff]
    %v136 = vld [vmem:[#allocation5 + $0x280] sm:$0xff]
    %v137 = vld [vmem:[#allocation5 + $0x288] sm:$0xff]
    %v138 = vld [vmem:[#allocation5 + $0x290] sm:$0xff]
    %v139 = vld [vmem:[#allocation5 + $0x298] sm:$0xff]
    %v140 = vld [vmem:[#allocation5 + $0x2a0] sm:$0xff]
    %v141 = vld [vmem:[#allocation5 + $0x2a8] sm:$0xff]
    %v142 = vld [vmem:[#allocation5 + $0x2b0] sm:$0xff]
    %v143 = vld [vmem:[#allocation5 + $0x2b8] sm:$0xff]
    %v144 = vld [vmem:[#allocation5 + $0x2c0] sm:$0xff]
    %v145 = vld [vmem:[#allocation5 + $0x2c8] sm:$0xff]
    %v146 = vld [vmem:[#allocation5 + $0x2d0] sm:$0xff]
    %v147 = vld [vmem:[#allocation5 + $0x2d8] sm:$0xff]
    %v148 = vld [vmem:[#allocation5 + $0x2e0] sm:$0xff]
    %v149 = vld [vmem:[#allocation5 + $0x2e8] sm:$0xff]
    %v150 = vld [vmem:[#allocation5 + $0x2f0] sm:$0xff]
    %v151 = vld [vmem:[#allocation5 + $0x2f8] sm:$0xff]
    %v152 = vld [vmem:[#allocation5 + $0x300] sm:$0xff]
    %v153 = vld [vmem:[#allocation5 + $0x308] sm:$0xff]
    %v154 = vld [vmem:[#allocation5 + $0x310] sm:$0xff]
    %v155 = vld [vmem:[#allocation5 + $0x318] sm:$0xff]
    %v156 = vld [vmem:[#allocation5 + $0x320] sm:$0xff]
    %v157 = vld [vmem:[#allocation5 + $0x328] sm:$0xff]
    %v158 = vld [vmem:[#allocation5 + $0x330] sm:$0xff]
    %v159 = vld [vmem:[#allocation5 + $0x338] sm:$0xff]
    %v160 = vld [vmem:[#allocation5 + $0x340] sm:$0xff]
    %v161 = vld [vmem:[#allocation5 + $0x348] sm:$0xff]
    %v162 = vld [vmem:[#allocation5 + $0x350] sm:$0xff]
    %v163 = vld [vmem:[#allocation5 + $0x358] sm:$0xff]
    %v164 = vld [vmem:[#allocation5 + $0x360] sm:$0xff]
    %v165 = vld [vmem:[#allocation5 + $0x368] sm:$0xff]
    %v166 = vld [vmem:[#allocation5 + $0x370] sm:$0xff]
    %v167 = vld [vmem:[#allocation5 + $0x378] sm:$0xff]
    %v168 = vld [vmem:[#allocation5 + $0x380] sm:$0xff]
    %v169 = vld [vmem:[#allocation5 + $0x388] sm:$0xff]
    %v170 = vld [vmem:[#allocation5 + $0x390] sm:$0xff]
    %v171 = vld [vmem:[#allocation5 + $0x398] sm:$0xff]
    %v172 = vld [vmem:[#allocation5 + $0x3a0] sm:$0xff]
    %v173 = vld [vmem:[#allocation5 + $0x3a8] sm:$0xff]
    %v174 = vld [vmem:[#allocation5 + $0x3b0] sm:$0xff]
    %v175 = vld [vmem:[#allocation5 + $0x3b8] sm:$0xff]
    %v176 = vld [vmem:[#allocation5 + $0x3c0] sm:$0xff]
    %v177 = vld [vmem:[#allocation5 + $0x3c8] sm:$0xff]
    %v178 = vld [vmem:[#allocation5 + $0x3d0] sm:$0xff]
    %v179 = vld [vmem:[#allocation5 + $0x3d8] sm:$0xff]
    %v180 = vld [vmem:[#allocation5 + $0x3e0] sm:$0xff]
    %v181 = vld [vmem:[#allocation5 + $0x3e8] sm:$0xff]
    %v182 = vld [vmem:[#allocation5 + $0x3f0] sm:$0xff]
    %v183 = vld [vmem:[#allocation5 + $0x3f8] sm:$0xff]
    %v184 = vld [vmem:[#allocation5 + $0x400] sm:$0xff]
    %v185 = vld [vmem:[#allocation5 + $0x408] sm:$0xff]
    %v186 = vld [vmem:[#allocation5 + $0x410] sm:$0xff]
    %v187 = vld [vmem:[#allocation5 + $0x418] sm:$0xff]
    %v188 = vld [vmem:[#allocation5 + $0x420] sm:$0xff]
    %v189 = vld [vmem:[#allocation5 + $0x428] sm:$0xff]
    %v190 = vld [vmem:[#allocation5 + $0x430] sm:$0xff]
    %v191 = vld [vmem:[#allocation5 + $0x438] sm:$0xff]
    %v192 = vld [vmem:[#allocation5 + $0x440] sm:$0xff]
    %v193 = vld [vmem:[#allocation5 + $0x448] sm:$0xff]
    %v194 = vld [vmem:[#allocation5 + $0x450] sm:$0xff]
    %v195 = vld [vmem:[#allocation5 + $0x458] sm:$0xff]
    %v196 = vld [vmem:[#allocation5 + $0x460] sm:$0xff]
    %v197 = vld [vmem:[#allocation5 + $0x468] sm:$0xff]
    %v198 = vld [vmem:[#allocation5 + $0x470] sm:$0xff]
    %v199 = vld [vmem:[#allocation5 + $0x478] sm:$0xff]
    %v200 = vld [vmem:[#allocation5 + $0x480] sm:$0xff]
    %v201 = vld [vmem:[#allocation5 + $0x488] sm:$0xff]
    %v202 = vld [vmem:[#allocation5 + $0x490] sm:$0xff]
    %v203 = vld [vmem:[#allocation5 + $0x498] sm:$0xff]
    %v204 = vld [vmem:[#allocation5 + $0x4a0] sm:$0xff]
    %v205 = vld [vmem:[#allocation5 + $0x4a8] sm:$0xff]
    %v206 = vld [vmem:[#allocation5 + $0x4b0] sm:$0xff]
    %v207 = vld [vmem:[#allocation5 + $0x4b8] sm:$0xff]
    %v208 = vld [vmem:[#allocation5 + $0x4c0] sm:$0xff]
    %v209 = vld [vmem:[#allocation5 + $0x4c8] sm:$0xff]
    %v210 = vld [vmem:[#allocation5 + $0x4d0] sm:$0xff]
    %v211 = vld [vmem:[#allocation5 + $0x4d8] sm:$0xff]
    %v212 = vld [vmem:[#allocation5 + $0x4e0] sm:$0xff]
    %v213 = vld [vmem:[#allocation5 + $0x4e8] sm:$0xff]
    %v214 = vld [vmem:[#allocation5 + $0x4f0] sm:$0xff]
    %v215 = vld [vmem:[#allocation5 + $0x4f8] sm:$0xff]
    %v216 = vld [vmem:[#allocation5 + $0x500] sm:$0xff]
    %v217 = vld [vmem:[#allocation5 + $0x508] sm:$0xff]
    %v218 = vld [vmem:[#allocation5 + $0x510] sm:$0xff]
    %v219 = vld [vmem:[#allocation5 + $0x518] sm:$0xff]
    %v220 = vld [vmem:[#allocation5 + $0x520] sm:$0xff]
    %v221 = vld [vmem:[#allocation5 + $0x528] sm:$0xff]
    %v222 = vld [vmem:[#allocation5 + $0x530] sm:$0xff]
    %v223 = vld [vmem:[#allocation5 + $0x538] sm:$0xff]
    %v224 = vld [vmem:[#allocation5 + $0x540] sm:$0xff]
    %v225 = vld [vmem:[#allocation5 + $0x548] sm:$0xff]
    %v226 = vld [vmem:[#allocation5 + $0x550] sm:$0xff]
    %v227 = vld [vmem:[#allocation5 + $0x558] sm:$0xff]
    %v228 = vld [vmem:[#allocation5 + $0x560] sm:$0xff]
    %v229 = vld [vmem:[#allocation5 + $0x568] sm:$0xff]
    %v230 = vld [vmem:[#allocation5 + $0x570] sm:$0xff]
    %v231 = vld [vmem:[#allocation5 + $0x578] sm:$0xff]
    %v232 = vld [vmem:[#allocation5 + $0x580] sm:$0xff]
    %v233 = vld [vmem:[#allocation5 + $0x588] sm:$0xff]
    %v234 = vld [vmem:[#allocation5 + $0x590] sm:$0xff]
    %v235 = vld [vmem:[#allocation5 + $0x598] sm:$0xff]
    %v236 = vld [vmem:[#allocation5 + $0x5a0] sm:$0xff]
    %v237 = vld [vmem:[#allocation5 + $0x5a8] sm:$0xff]
    %v238 = vld [vmem:[#allocation5 + $0x5b0] sm:$0xff]
    %v239 = vld [vmem:[#allocation5 + $0x5b8] sm:$0xff]
    %v240 = vld [vmem:[#allocation5 + $0x5c0] sm:$0xff]
    %v241 = vld [vmem:[#allocation5 + $0x5c8] sm:$0xff]
    %v242 = vld [vmem:[#allocation5 + $0x5d0] sm:$0xff]
    %v243 = vld [vmem:[#allocation5 + $0x5d8] sm:$0xff]
    %v244 = vld [vmem:[#allocation5 + $0x5e0] sm:$0xff]
    %v245 = vld [vmem:[#allocation5 + $0x5e8] sm:$0xff]
    %v246 = vld [vmem:[#allocation5 + $0x5f0] sm:$0xff]
    %v247 = vld [vmem:[#allocation5 + $0x5f8] sm:$0xff]
    %v248 = vld [vmem:[#allocation5 + $0x600] sm:$0xff]
    %v249 = vld [vmem:[#allocation5 + $0x608] sm:$0xff]
    %v250 = vld [vmem:[#allocation5 + $0x610] sm:$0xff]
    %v251 = vld [vmem:[#allocation5 + $0x618] sm:$0xff]
    %v252 = vld [vmem:[#allocation5 + $0x620] sm:$0xff]
    %v253 = vld [vmem:[#allocation5 + $0x628] sm:$0xff]
    %v254 = vld [vmem:[#allocation5 + $0x630] sm:$0xff]
    %v255 = vld [vmem:[#allocation5 + $0x638] sm:$0xff]
    %v256 = vld [vmem:[#allocation5 + $0x640] sm:$0xff]
    %v257 = vld [vmem:[#allocation5 + $0x648] sm:$0xff]
    %v258 = vld [vmem:[#allocation5 + $0x650] sm:$0xff]
    %v259 = vld [vmem:[#allocation5 + $0x658] sm:$0xff]
    %v260 = vld [vmem:[#allocation5 + $0x660] sm:$0xff]
    %v261 = vld [vmem:[#allocation5 + $0x668] sm:$0xff]
    %v262 = vld [vmem:[#allocation5 + $0x670] sm:$0xff]
    %v263 = vld [vmem:[#allocation5 + $0x678] sm:$0xff]
    %v264 = vld [vmem:[#allocation5 + $0x680] sm:$0xff]
    %v265 = vld [vmem:[#allocation5 + $0x688] sm:$0xff]
    %v266 = vld [vmem:[#allocation5 + $0x690] sm:$0xff]
    %v267 = vld [vmem:[#allocation5 + $0x698] sm:$0xff]
    %v268 = vld [vmem:[#allocation5 + $0x6a0] sm:$0xff]
    %v269 = vld [vmem:[#allocation5 + $0x6a8] sm:$0xff]
    %v270 = vld [vmem:[#allocation5 + $0x6b0] sm:$0xff]
    %v271 = vld [vmem:[#allocation5 + $0x6b8] sm:$0xff]
    %v272 = vld [vmem:[#allocation5 + $0x6c0] sm:$0xff]
    %v273 = vld [vmem:[#allocation5 + $0x6c8] sm:$0xff]
    %v274 = vld [vmem:[#allocation5 + $0x6d0] sm:$0xff]
    %v275 = vld [vmem:[#allocation5 + $0x6d8] sm:$0xff]
    %v276 = vld [vmem:[#allocation5 + $0x6e0] sm:$0xff]
    %v277 = vld [vmem:[#allocation5 + $0x6e8] sm:$0xff]
    %v278 = vld [vmem:[#allocation5 + $0x6f0] sm:$0xff]
    %v279 = vld [vmem:[#allocation5 + $0x6f8] sm:$0xff]
    %v280 = vld [vmem:[#allocation5 + $0x700] sm:$0xff]
    %v281 = vld [vmem:[#allocation5 + $0x708] sm:$0xff]
    %v282 = vld [vmem:[#allocation5 + $0x710] sm:$0xff]
    %v283 = vld [vmem:[#allocation5 + $0x718] sm:$0xff]
    %v284 = vld [vmem:[#allocation5 + $0x720] sm:$0xff]
    %v285 = vld [vmem:[#allocation5 + $0x728] sm:$0xff]
    %v286 = vld [vmem:[#allocation5 + $0x730] sm:$0xff]
    %v287 = vld [vmem:[#allocation5 + $0x738] sm:$0xff]
    %v288 = vld [vmem:[#allocation5 + $0x740] sm:$0xff]
    %v289 = vld [vmem:[#allocation5 + $0x748] sm:$0xff]
    %v290 = vld [vmem:[#allocation5 + $0x750] sm:$0xff]
    %v291 = vld [vmem:[#allocation5 + $0x758] sm:$0xff]
    %v292 = vld [vmem:[#allocation5 + $0x760] sm:$0xff]
    %v293 = vld [vmem:[#allocation5 + $0x768] sm:$0xff]
    %v294 = vld [vmem:[#allocation5 + $0x770] sm:$0xff]
    %v295 = vld [vmem:[#allocation5 + $0x778] sm:$0xff]
    %v296 = vld [vmem:[#allocation5 + $0x780] sm:$0xff]
    %v297 = vld [vmem:[#allocation5 + $0x788] sm:$0xff]
    %v298 = vld [vmem:[#allocation5 + $0x790] sm:$0xff]
    %v299 = vld [vmem:[#allocation5 + $0x798] sm:$0xff]
    %v300 = vld [vmem:[#allocation5 + $0x7a0] sm:$0xff]
    %v301 = vld [vmem:[#allocation5 + $0x7a8] sm:$0xff]
    %v302 = vld [vmem:[#allocation5 + $0x7b0] sm:$0xff]
    %v303 = vld [vmem:[#allocation5 + $0x7b8] sm:$0xff]
    %v304 = vld [vmem:[#allocation5 + $0x7c0] sm:$0xff]
    %v305 = vld [vmem:[#allocation5 + $0x7c8] sm:$0xff]
    %v306 = vld [vmem:[#allocation5 + $0x7d0] sm:$0xff]
    %v307 = vld [vmem:[#allocation5 + $0x7d8] sm:$0xff]
    %v308 = vld [vmem:[#allocation5 + $0x7e0] sm:$0xff]
    %v309 = vld [vmem:[#allocation5 + $0x7e8] sm:$0xff]
    %v310 = vld [vmem:[#allocation5 + $0x7f0] sm:$0xff]
    %v311 = vld [vmem:[#allocation5 + $0x7f8] sm:$0xff]
    %312 = vmatpush.msra.mxu0 %v86
    %313 = vmatpush.msra.mxu0 %v84
    %314 = vmatpush.msra.mxu0 %v82
    %315 = vmatpush.msra.mxu0 %v80
    %316 = vmatpush.msra.mxu0 %v78
    %317 = vmatpush.msra.mxu0 %v76
    %318 = vmatpush.msra.mxu0 %v74
    %319 = vmatpush.msra.mxu0 %v72
    %320 = vmatpush.msra.mxu0 %v70
    %321 = vmatpush.msra.mxu0 %v68
    %322 = vmatpush.msra.mxu0 %v66
    %323 = vmatpush.msra.mxu0 %v64
    %324 = vmatpush.msra.mxu0 %v62
    %325 = vmatpush.msra.mxu0 %v60
    %326 = vmatpush.msra.mxu0 %v58
    %327 = vmatpush.msra.mxu0 %v56
    %328 = vmatmul.f32.gmra.mxu0 %v48
    %v329 = vpop.f32.mrf.mxu0
    %v330 = vadd.f32 0.0, %v329
    %331 = vdwg.mxu0
    %332 = vmatpush.msra.mxu0 %v118
    %333 = vmatpush.msra.mxu0 %v116
    %334 = vmatpush.msra.mxu0 %v114
    %335 = vmatpush.msra.mxu0 %v112
    %336 = vmatpush.msra.mxu0 %v110
    %337 = vmatpush.msra.mxu0 %v108
    %338 = vmatpush.msra.mxu0 %v106
    %339 = vmatpush.msra.mxu0 %v104
    %340 = vmatpush.msra.mxu0 %v102
    %341 = vmatpush.msra.mxu0 %v100
    %342 = vmatpush.msra.mxu0 %v98
    %343 = vmatpush.msra.mxu0 %v96
    %344 = vmatpush.msra.mxu0 %v94
    %345 = vmatpush.msra.mxu0 %v92
    %346 = vmatpush.msra.mxu0 %v90
    %347 = vmatpush.msra.mxu0 %v88
    %348 = vmatmul.f32.gmra.mxu0 %v49
    %v349 = vpop.f32.mrf.mxu0
    %v350 = vadd.f32 %v330, %v349
    %351 = vdwg.mxu0
    %352 = vmatpush.msra.mxu0 %v150
    %353 = vmatpush.msra.mxu0 %v148
    %354 = vmatpush.msra.mxu0 %v146
    %355 = vmatpush.msra.mxu0 %v144
    %356 = vmatpush.msra.mxu0 %v142
    %357 = vmatpush.msra.mxu0 %v140
    %358 = vmatpush.msra.mxu0 %v138
    %359 = vmatpush.msra.mxu0 %v136
    %360 = vmatpush.msra.mxu0 %v134
    %361 = vmatpush.msra.mxu0 %v132
    %362 = vmatpush.msra.mxu0 %v130
    %363 = vmatpush.msra.mxu0 %v128
    %364 = vmatpush.msra.mxu0 %v126
    %365 = vmatpush.msra.mxu0 %v124
    %366 = vmatpush.msra.mxu0 %v122
    %367 = vmatpush.msra.mxu0 %v120
    %368 = vmatmul.f32.gmra.mxu0 %v50
    %v369 = vpop.f32.mrf.mxu0
    %v370 = vadd.f32 %v350, %v369
    %371 = vdwg.mxu0
    %372 = vmatpush.msra.mxu0 %v182
    %373 = vmatpush.msra.mxu0 %v180
    %374 = vmatpush.msra.mxu0 %v178
    %375 = vmatpush.msra.mxu0 %v176
    %376 = vmatpush.msra.mxu0 %v174
    %377 = vmatpush.msra.mxu0 %v172
    %378 = vmatpush.msra.mxu0 %v170
    %379 = vmatpush.msra.mxu0 %v168
    %380 = vmatpush.msra.mxu0 %v166
    %381 = vmatpush.msra.mxu0 %v164
    %382 = vmatpush.msra.mxu0 %v162
    %383 = vmatpush.msra.mxu0 %v160
    %384 = vmatpush.msra.mxu0 %v158
    %385 = vmatpush.msra.mxu0 %v156
    %386 = vmatpush.msra.mxu0 %v154
    %387 = vmatpush.msra.mxu0 %v152
    %388 = vmatmul.f32.gmra.mxu0 %v51
    %v389 = vpop.f32.mrf.mxu0
    %v390 = vadd.f32 %v370, %v389
    %391 = vdwg.mxu0
    %392 = vmatpush.msra.mxu0 %v214
    %393 = vmatpush.msra.mxu0 %v212
    %394 = vmatpush.msra.mxu0 %v210
    %395 = vmatpush.msra.mxu0 %v208
    %396 = vmatpush.msra.mxu0 %v206
    %397 = vmatpush.msra.mxu0 %v204
    %398 = vmatpush.msra.mxu0 %v202
    %399 = vmatpush.msra.mxu0 %v200
    %400 = vmatpush.msra.mxu0 %v198
    %401 = vmatpush.msra.mxu0 %v196
    %402 = vmatpush.msra.mxu0 %v194
    %403 = vmatpush.msra.mxu0 %v192
    %404 = vmatpush.msra.mxu0 %v190
    %405 = vmatpush.msra.mxu0 %v188
    %406 = vmatpush.msra.mxu0 %v186
    %407 = vmatpush.msra.mxu0 %v184
    %408 = vmatmul.f32.gmra.mxu0 %v52
    %v409 = vpop.f32.mrf.mxu0
    %v410 = vadd.f32 %v390, %v409
    %411 = vdwg.mxu0
    %412 = vmatpush.msra.mxu0 %v246
    %413 = vmatpush.msra.mxu0 %v244
    %414 = vmatpush.msra.mxu0 %v242
    %415 = vmatpush.msra.mxu0 %v240
    %416 = vmatpush.msra.mxu0 %v238
    %417 = vmatpush.msra.mxu0 %v236
    %418 = vmatpush.msra.mxu0 %v234
    %419 = vmatpush.msra.mxu0 %v232
    %420 = vmatpush.msra.mxu0 %v230
    %421 = vmatpush.msra.mxu0 %v228
    %422 = vmatpush.msra.mxu0 %v226
    %423 = vmatpush.msra.mxu0 %v224
    %424 = vmatpush.msra.mxu0 %v222
    %425 = vmatpush.msra.mxu0 %v220
    %426 = vmatpush.msra.mxu0 %v218
    %427 = vmatpush.msra.mxu0 %v216
    %428 = vmatmul.f32.gmra.mxu0 %v53
    %v429 = vpop.f32.mrf.mxu0
    %v430 = vadd.f32 %v410, %v429
    %431 = vdwg.mxu0
    %432 = vmatpush.msra.mxu0 %v278
    %433 = vmatpush.msra.mxu0 %v276
    %434 = vmatpush.msra.mxu0 %v274
    %435 = vmatpush.msra.mxu0 %v272
    %436 = vmatpush.msra.mxu0 %v270
    %437 = vmatpush.msra.mxu0 %v268
    %438 = vmatpush.msra.mxu0 %v266
    %439 = vmatpush.msra.mxu0 %v264
    %440 = vmatpush.msra.mxu0 %v262
    %441 = vmatpush.msra.mxu0 %v260
    %442 = vmatpush.msra.mxu0 %v258
    %443 = vmatpush.msra.mxu0 %v256
    %444 = vmatpush.msra.mxu0 %v254
    %445 = vmatpush.msra.mxu0 %v252
    %446 = vmatpush.msra.mxu0 %v250
    %447 = vmatpush.msra.mxu0 %v248
    %448 = vmatmul.f32.gmra.mxu0 %v54
    %v449 = vpop.f32.mrf.mxu0
    %v450 = vadd.f32 %v430, %v449
    %451 = vdwg.mxu0
    %452 = vmatpush.msra.mxu0 %v310
    %453 = vmatpush.msra.mxu0 %v308
    %454 = vmatpush.msra.mxu0 %v306
    %455 = vmatpush.msra.mxu0 %v304
    %456 = vmatpush.msra.mxu0 %v302
    %457 = vmatpush.msra.mxu0 %v300
    %458 = vmatpush.msra.mxu0 %v298
    %459 = vmatpush.msra.mxu0 %v296
    %460 = vmatpush.msra.mxu0 %v294
    %461 = vmatpush.msra.mxu0 %v292
    %462 = vmatpush.msra.mxu0 %v290
    %463 = vmatpush.msra.mxu0 %v288
    %464 = vmatpush.msra.mxu0 %v286
    %465 = vmatpush.msra.mxu0 %v284
    %466 = vmatpush.msra.mxu0 %v282
    %467 = vmatpush.msra.mxu0 %v280
    %468 = vmatmul.f32.gmra.mxu0 %v55
    %v469 = vpop.f32.mrf.mxu0
    %v470 = vadd.f32 %v450, %v469
    %471 = vdwg.mxu0
    %472 = vmatpush.msra.mxu0 %v87
    %473 = vmatpush.msra.mxu0 %v85
    %474 = vmatpush.msra.mxu0 %v83
    %475 = vmatpush.msra.mxu0 %v81
    %476 = vmatpush.msra.mxu0 %v79
    %477 = vmatpush.msra.mxu0 %v77
    %478 = vmatpush.msra.mxu0 %v75
    %479 = vmatpush.msra.mxu0 %v73
    %480 = vmatpush.msra.mxu0 %v71
    %481 = vmatpush.msra.mxu0 %v69
    %482 = vmatpush.msra.mxu0 %v67
    %483 = vmatpush.msra.mxu0 %v65
    %484 = vmatpush.msra.mxu0 %v63
    %485 = vmatpush.msra.mxu0 %v61
    %486 = vmatpush.msra.mxu0 %v59
    %487 = vmatpush.msra.mxu0 %v57
    %488 = vmatmul.f32.gmra.mxu0 %v48
    %v489 = vpop.f32.mrf.mxu0
    %v490 = vadd.f32 0.0, %v489
    %491 = vdwg.mxu0
    %492 = vmatpush.msra.mxu0 %v119
    %493 = vmatpush.msra.mxu0 %v117
    %494 = vmatpush.msra.mxu0 %v115
    %495 = vmatpush.msra.mxu0 %v113
    %496 = vmatpush.msra.mxu0 %v111
    %497 = vmatpush.msra.mxu0 %v109
    %498 = vmatpush.msra.mxu0 %v107
    %499 = vmatpush.msra.mxu0 %v105
    %500 = vmatpush.msra.mxu0 %v103
    %501 = vmatpush.msra.mxu0 %v101
    %502 = vmatpush.msra.mxu0 %v99
    %503 = vmatpush.msra.mxu0 %v97
    %504 = vmatpush.msra.mxu0 %v95
    %505 = vmatpush.msra.mxu0 %v93
    %506 = vmatpush.msra.mxu0 %v91
    %507 = vmatpush.msra.mxu0 %v89
    %508 = vmatmul.f32.gmra.mxu0 %v49
    %v509 = vpop.f32.mrf.mxu0
    %v510 = vadd.f32 %v490, %v509
    %511 = vdwg.mxu0
    %512 = vmatpush.msra.mxu0 %v151
    %513 = vmatpush.msra.mxu0 %v149
    %514 = vmatpush.msra.mxu0 %v147
    %515 = vmatpush.msra.mxu0 %v145
    %516 = vmatpush.msra.mxu0 %v143
    %517 = vmatpush.msra.mxu0 %v141
    %518 = vmatpush.msra.mxu0 %v139
    %519 = vmatpush.msra.mxu0 %v137
    %520 = vmatpush.msra.mxu0 %v135
    %521 = vmatpush.msra.mxu0 %v133
    %522 = vmatpush.msra.mxu0 %v131
    %523 = vmatpush.msra.mxu0 %v129
    %524 = vmatpush.msra.mxu0 %v127
    %525 = vmatpush.msra.mxu0 %v125
    %526 = vmatpush.msra.mxu0 %v123
    %527 = vmatpush.msra.mxu0 %v121
    %528 = vmatmul.f32.gmra.mxu0 %v50
    %v529 = vpop.f32.mrf.mxu0
    %v530 = vadd.f32 %v510, %v529
    %531 = vdwg.mxu0
    %532 = vmatpush.msra.mxu0 %v183
    %533 = vmatpush.msra.mxu0 %v181
    %534 = vmatpush.msra.mxu0 %v179
    %535 = vmatpush.msra.mxu0 %v177
    %536 = vmatpush.msra.mxu0 %v175
    %537 = vmatpush.msra.mxu0 %v173
    %538 = vmatpush.msra.mxu0 %v171
    %539 = vmatpush.msra.mxu0 %v169
    %540 = vmatpush.msra.mxu0 %v167
    %541 = vmatpush.msra.mxu0 %v165
    %542 = vmatpush.msra.mxu0 %v163
    %543 = vmatpush.msra.mxu0 %v161
    %544 = vmatpush.msra.mxu0 %v159
    %545 = vmatpush.msra.mxu0 %v157
    %546 = vmatpush.msra.mxu0 %v155
    %547 = vmatpush.msra.mxu0 %v153
    %548 = vmatmul.f32.gmra.mxu0 %v51
    %v549 = vpop.f32.mrf.mxu0
    %v550 = vadd.f32 %v530, %v549
    %551 = vdwg.mxu0
    %552 = vmatpush.msra.mxu0 %v215
    %553 = vmatpush.msra.mxu0 %v213
    %554 = vmatpush.msra.mxu0 %v211
    %555 = vmatpush.msra.mxu0 %v209
    %556 = vmatpush.msra.mxu0 %v207
    %557 = vmatpush.msra.mxu0 %v205
    %558 = vmatpush.msra.mxu0 %v203
    %559 = vmatpush.msra.mxu0 %v201
    %560 = vmatpush.msra.mxu0 %v199
    %561 = vmatpush.msra.mxu0 %v197
    %562 = vmatpush.msra.mxu0 %v195
    %563 = vmatpush.msra.mxu0 %v193
    %564 = vmatpush.msra.mxu0 %v191
    %565 = vmatpush.msra.mxu0 %v189
    %566 = vmatpush.msra.mxu0 %v187
    %567 = vmatpush.msra.mxu0 %v185
    %568 = vmatmul.f32.gmra.mxu0 %v52
    %v569 = vpop.f32.mrf.mxu0
    %v570 = vadd.f32 %v550, %v569
    %571 = vdwg.mxu0
    %572 = vmatpush.msra.mxu0 %v247
    %573 = vmatpush.msra.mxu0 %v245
    %574 = vmatpush.msra.mxu0 %v243
    %575 = vmatpush.msra.mxu0 %v241
    %576 = vmatpush.msra.mxu0 %v239
    %577 = vmatpush.msra.mxu0 %v237
    %578 = vmatpush.msra.mxu0 %v235
    %579 = vmatpush.msra.mxu0 %v233
    %580 = vmatpush.msra.mxu0 %v231
    %581 = vmatpush.msra.mxu0 %v229
    %582 = vmatpush.msra.mxu0 %v227
    %583 = vmatpush.msra.mxu0 %v225
    %584 = vmatpush.msra.mxu0 %v223
    %585 = vmatpush.msra.mxu0 %v221
    %586 = vmatpush.msra.mxu0 %v219
    %587 = vmatpush.msra.mxu0 %v217
    %588 = vmatmul.f32.gmra.mxu0 %v53
    %v589 = vpop.f32.mrf.mxu0
    %v590 = vadd.f32 %v570, %v589
    %591 = vdwg.mxu0
    %592 = vmatpush.msra.mxu0 %v279
    %593 = vmatpush.msra.mxu0 %v277
    %594 = vmatpush.msra.mxu0 %v275
    %595 = vmatpush.msra.mxu0 %v273
    %596 = vmatpush.msra.mxu0 %v271
    %597 = vmatpush.msra.mxu0 %v269
    %598 = vmatpush.msra.mxu0 %v267
    %599 = vmatpush.msra.mxu0 %v265
    %600 = vmatpush.msra.mxu0 %v263
    %601 = vmatpush.msra.mxu0 %v261
    %602 = vmatpush.msra.mxu0 %v259
    %603 = vmatpush.msra.mxu0 %v257
    %604 = vmatpush.msra.mxu0 %v255
    %605 = vmatpush.msra.mxu0 %v253
    %606 = vmatpush.msra.mxu0 %v251
    %607 = vmatpush.msra.mxu0 %v249
    %608 = vmatmul.f32.gmra.mxu0 %v54
    %v609 = vpop.f32.mrf.mxu0
    %v610 = vadd.f32 %v590, %v609
    %611 = vdwg.mxu0
    %612 = vmatpush.msra.mxu0 %v311
    %613 = vmatpush.msra.mxu0 %v309
    %614 = vmatpush.msra.mxu0 %v307
    %615 = vmatpush.msra.mxu0 %v305
    %616 = vmatpush.msra.mxu0 %v303
    %617 = vmatpush.msra.mxu0 %v301
    %618 = vmatpush.msra.mxu0 %v299
    %619 = vmatpush.msra.mxu0 %v297
    %620 = vmatpush.msra.mxu0 %v295
    %621 = vmatpush.msra.mxu0 %v293
    %622 = vmatpush.msra.mxu0 %v291
    %623 = vmatpush.msra.mxu0 %v289
    %624 = vmatpush.msra.mxu0 %v287
    %625 = vmatpush.msra.mxu0 %v285
    %626 = vmatpush.msra.mxu0 %v283
    %627 = vmatpush.msra.mxu0 %v281
    %628 = vmatmul.f32.gmra.mxu0 %v55
    %v629 = vpop.f32.mrf.mxu0
    %v630 = vadd.f32 %v610, %v629
    %631 = vdwg.mxu0
    %v632 = vld [vmem:[%s2] sm:$0xff]
    %v633 = vld [vmem:[%s2 + $0x8] sm:$0xff]
    %v634 = vld [vmem:[%s3] sm:$0xff]
    %v635 = vld [vmem:[%s3 + $0x8] sm:$0xff]
    %637 = vset.pattern.permute.xlu0 0
    %638 = vperm.xlu0 %637, %v634
    %v639 = vpop.permute.xlu0 %638
    %642 = vset.pattern.permute.xlu0 0
    %643 = vperm.xlu0 %642, %v635
    %v644 = vpop.permute.xlu0 %643
    %vm646 = vcmask 64512
    %v648 = vsel %vm646, %v632, 0
    %v651 = vsel %vm646, %v633, 0
    %653 = vmatpush.msra.mxu0 0.0
    %654 = vmatpush.msra.mxu0 0.0
    %655 = vmatpush.msra.mxu0 0.0
    %656 = vmatpush.msra.mxu0 0.0
    %657 = vmatpush.msra.mxu0 0.0
    %658 = vmatpush.msra.mxu0 0.0
    %659 = vmatpush.msra.mxu0 0.0
    %660 = vmatpush.msra.mxu0 0.0
    %661 = vmatpush.msra.mxu0 0.0
    %662 = vmatpush.msra.mxu0 0.0
    %663 = vmatpush.msra.mxu0 0.0
    %664 = vmatpush.msra.mxu0 0.0
    %665 = vmatpush.msra.mxu0 0.0
    %666 = vmatpush.msra.mxu0 0.0
    %667 = vmatpush.msra.mxu0 0.0
    %668 = vmatpush.msra.mxu0 %v470
    %669 = vmatmul.f32.gmra.mxu0 %v648
    %v670 = vpop.f32.mrf.mxu0
    %v671 = vadd.f32 %v639, %v670
    %672 = vmatmul.f32.gmra.mxu0 %v651
    %v673 = vpop.f32.mrf.mxu0
    %v674 = vadd.f32 %v644, %v673
    %675 = vdwg.mxu0
    %676 = vmatpush.msra.mxu0 0.0
    %677 = vmatpush.msra.mxu0 0.0
    %678 = vmatpush.msra.mxu0 0.0
    %679 = vmatpush.msra.mxu0 0.0
    %680 = vmatpush.msra.mxu0 0.0
    %681 = vmatpush.msra.mxu0 0.0
    %682 = vmatpush.msra.mxu0 0.0
    %683 = vmatpush.msra.mxu0 0.0
    %684 = vmatpush.msra.mxu0 0.0
    %685 = vmatpush.msra.mxu0 0.0
    %686 = vmatpush.msra.mxu0 0.0
    %687 = vmatpush.msra.mxu0 0.0
    %688 = vmatpush.msra.mxu0 0.0
    %689 = vmatpush.msra.mxu0 0.0
    %690 = vmatpush.msra.mxu0 0.0
    %691 = vmatpush.msra.mxu0 %v630
    %692 = vmatmul.f32.gmra.mxu0 %v648
    %v693 = vpop.f32.mrf.mxu0
    %v694 = vadd.f32 %v639, %v693
    %695 = vmatmul.f32.gmra.mxu0 %v651
    %v696 = vpop.f32.mrf.mxu0
    %v697 = vadd.f32 %v644, %v696
    %698 = vdwg.mxu0
    %v699 = vmax.f32 %v671, 0.0
    %v700 = vmax.f32 %v694, 0.0
    %v701 = vmax.f32 %v674, 0.0
    %v702 = vmax.f32 %v697, 0.0
    %703 = vst [vmem:[#allocation7] sm:$0xff] %v699
    %704 = vst [vmem:[#allocation7 + $0x8] sm:$0xff] %v700
    %705 = vst [vmem:[#allocation7 + $0x10] sm:$0xff] %v701
    %706 = vst [vmem:[#allocation7 + $0x18] sm:$0xff] %v702
    // Predicated region
    $region26: #{tpu_custom_call.1} parent=1 // pred_check
      _
    $region27: #{tpu_custom_call.1} parent=1 // pred_check_branch
      %708 = sbr.rel (0) target = $region29
    $region28: #{tpu_custom_call.1} parent=1 // pred_region
      %710 = vsyncadd [#allocation4], 0
      %s711 = sshll.u32 [#allocation7], 4
      %s712 = int_to_ptr.vmem [resolvable:$true] %s711
      %s713 = sshll.u32 %s4, 4
      %s714 = int_to_ptr.hbm [resolvable:$true] %s713
      %719 = dma.vmem_to_hbm [thread:$0]  %s712, 512, %s714, [#allocation4], 256, 256, 16
    $region29: #{tpu_custom_call.1} parent=1 // pred_fallthru
      _
    // Predicated region
    $region30: #{tpu_custom_call.1} parent=1 // pred_check
      _
    $region31: #{tpu_custom_call.1} parent=1 // pred_check_branch
      %721 = sbr.rel (0) target = $region33
    $region32: #{tpu_custom_call.1} parent=1 // pred_region
      %723 = dma.done [#allocation4], 512
    $region33: #{tpu_custom_call.1} parent=1 // pred_fallthru
      _
    %724 = vsyncpa [#allocation3], 1
    %725 = vsyncpa [#allocation6], 1
    %726 = vsyncpa [#allocation4], 1

</llo_original>
